<compile_context>
chip_gen: v7x
topology: tpu7x:2x2x1
jax: 0.10.0
libtpu: 0.0.40
codegen_flags: <defaults>
</compile_context>

<pallas_src>
import math

import jax
import jax.numpy as jnp
from jax.experimental import pallas as pl
from jax.experimental.pallas import tpu as pltpu

LN_EPS = 1e-5
NEG_BIG = -1e30          # "minus infinity" for the padded logit lanes
LANES = 128              # lane width of padded logits / output slab
NUM_CLASSES = 3
_INV_SQRT2 = 1.0 / math.sqrt(2.0)


def _erf_approx(x):
    # Abramowitz & Stegun 7.1.26, |err| <= 1.5e-7 (essentially exact GELU).
    # Kept instead of jax.lax.erf to guarantee Mosaic lowering; the extra VALU
    # work is hidden under the matmul / DMA for this kernel.
    a1, a2, a3, a4, a5 = 0.254829592, -0.284496736, 1.421413741, -1.453152027, 1.061405429
    p = 0.3275911
    sign = jnp.where(x >= 0.0, 1.0, -1.0)
    ax = jnp.abs(x)
    t = 1.0 / (1.0 + p * ax)
    poly = ((((a5 * t + a4) * t + a3) * t + a2) * t + a1) * t
    return sign * (1.0 - poly * jnp.exp(-ax * ax))


def _gelu(x):
    # Exact (erf-based) GELU: 0.5 * x * (1 + erf(x / sqrt(2)))
    return 0.5 * x * (1.0 + _erf_approx(x * _INV_SQRT2))


def _round_up(x, m):
    return ((x + m - 1) // m) * m


def change_ratio_kernel(enc_ref, bias_ref, mask_ref,
                        w1_ref, gamma_ref, beta_ref, w2_ref, b2_ref,
                        out_ref):
    # enc_ref  : [1, T, H]    encoded-number rows for one batch (row tile), matmul_dtype
    # bias_ref : [1, 1, H]    per-batch folded bias = [q,p,cls] @ W1[H:] + b1  (f32)
    # mask_ref : [1, T, 1]    number mask (int32)
    # w1_ref   : [H, H]       W1[:H] (encoded-number slice), matmul_dtype
    # gamma/beta: [1, H]      LayerNorm affine (f32)
    # w2_ref   : [H, 128]     W2 zero-padded to 128 lanes (f32)
    # b2_ref   : [1, 128]     b2, padded lanes filled with NEG_BIG (f32)
    # out_ref  : [1, T, 128]  lane-dense slab: cols 0..2 = log_probs, col 3 = sign
    enc = enc_ref[0]                                                 # [T, H]
    bias = bias_ref[0]                                               # [1, H]

    # fc1 on the encoded-number slice only; q/p/cls live in the folded bias row.
    hid = jnp.dot(enc, w1_ref[...], preferred_element_type=jnp.float32) + bias
    hid = _gelu(hid)

    # LayerNorm with fused single-sweep statistics.
    inv_h = 1.0 / hid.shape[-1]
    s1 = jnp.sum(hid, axis=-1, keepdims=True)
    s2 = jnp.sum(hid * hid, axis=-1, keepdims=True)
    mu = s1 * inv_h
    var = s2 * inv_h - mu * mu
    hid = (hid - mu) * jax.lax.rsqrt(var + LN_EPS)
    hid = hid * gamma_ref[...] + beta_ref[...]

    # fc2 with lane-padded output: padded columns get bias NEG_BIG so they
    # contribute exp(~-inf) = 0 to the softmax and never win the argmax.
    logits = jnp.dot(hid, w2_ref[...], preferred_element_type=jnp.float32) + b2_ref[...]

    # log-softmax along lanes (f32).
    m = jnp.max(logits, axis=-1, keepdims=True)
    z = logits - m
    lse = jnp.log(jnp.sum(jnp.exp(z), axis=-1, keepdims=True))
    logp = z - lse                                                   # [T, 128]

    # argmax, first-max-wins (matches torch / jnp tie-breaking): among the
    # columns equal to the row max, take the smallest column index.
    col = jax.lax.broadcasted_iota(jnp.int32, logits.shape, 1)
    colf = col.astype(jnp.float32)
    idx = jnp.min(jnp.where(logits >= m, colf, float(LANES)),
                  axis=-1, keepdims=True)                            # [T, 1] in {0,1,2}

    sign = jnp.where(mask_ref[0] > 0, idx, -1.0)                     # [T, 1] f32

    # Pack log_probs (cols 0..2) and the sign (col 3) into one lane-dense store.
    out_ref[0] = jnp.where(col == NUM_CLASSES, sign, logp)


def change_ratio_forward(encoded_numbers, question_hidden, passage_hidden,
                         sequence_output, number_mask, params,
                         matmul_dtype=jnp.bfloat16, max_tile_n=512):
    """Returns (log_probs [B,N,3] f32, best_signs [B,N] i32)."""
    B, N, H = encoded_numbers.shape
    f32 = jnp.float32
    w1, b1 = params["w1"].astype(f32), params["b1"].astype(f32)
    gamma, beta = params["gamma"].astype(f32), params["beta"].astype(f32)
    w2, b2 = params["w2"].astype(f32), params["b2"].astype(f32)

    # ---- fold q / p / cls into a per-batch bias (tiny XLA matmul, [B,3H] @ [3H,H]) ----
    w1_enc = w1[:H]                                # [H, H]   used by the kernel (MXU)
    w1_rest = w1[H:]                               # [3H, H]  folded here
    qpc = jnp.concatenate(
        [question_hidden, passage_hidden, sequence_output[:, 0]], axis=-1).astype(f32)
    bias_b = (qpc @ w1_rest + b1).reshape(B, 1, H)                   # [B, 1, H]

    # ---- tile the number axis; pad to a multiple of the tile ----
    tile = min(max_tile_n, _round_up(N, 8))
    n_pad = _round_up(N, tile)
    pad = n_pad - N

    enc = encoded_numbers.astype(matmul_dtype)                       # [B, N, H]
    mask = number_mask.astype(jnp.int32).reshape(B, N, 1)
    if pad:
        enc = jnp.pad(enc, ((0, 0), (0, pad), (0, 0)))
        mask = jnp.pad(mask, ((0, 0), (0, pad), (0, 0)))

    # ---- weights: bf16 (or f32) MXU input for fc1; lane-pad W2/b2 to 128 ----
    w1_k = w1_enc.astype(matmul_dtype)
    gamma_r = gamma.reshape(1, H)
    beta_r = beta.reshape(1, H)
    w2_pad = jnp.zeros((H, LANES), f32).at[:, :NUM_CLASSES].set(w2)
    b2_pad = jnp.full((1, LANES), NEG_BIG, f32).at[0, :NUM_CLASSES].set(b2)

    grid = (B, n_pad // tile)
    const2d = lambda arr: pl.BlockSpec(arr.shape, lambda b, j: (0, 0))

    slab = pl.pallas_call(
        change_ratio_kernel,
        out_shape=jax.ShapeDtypeStruct((B, n_pad, LANES), f32),
        grid=grid,
        in_specs=[
            pl.BlockSpec((1, tile, H), lambda b, j: (b, j, 0)),      # encoded numbers
            pl.BlockSpec((1, 1, H), lambda b, j: (b, 0, 0)),         # per-batch folded bias
            pl.BlockSpec((1, tile, 1), lambda b, j: (b, j, 0)),      # number mask
            const2d(w1_k),                                           # W1[:H]
            const2d(gamma_r),                                        # LN gamma
            const2d(beta_r),                                         # LN beta
            const2d(w2_pad),                                         # W2 (lane padded)
            const2d(b2_pad),                                         # b2 (lane padded)
        ],
        out_specs=pl.BlockSpec((1, tile, LANES), lambda b, j: (b, j, 0)),
        compiler_params=pltpu.CompilerParams(
            dimension_semantics=("parallel", "parallel"),
            # Generous for production H while safe on v7x's 64 MiB VMEM; the toy
            # problem needs far less.
            vmem_limit_bytes=32 * 1024 * 1024,
        ),
    )(enc, bias_b, mask, w1_k, gamma_r, beta_r, w2_pad, b2_pad)

    slab = slab[:, :N]
    log_probs = slab[..., :NUM_CLASSES]
    best_signs = slab[..., NUM_CLASSES].astype(jnp.int32)
    return log_probs, best_signs


def reference_forward(encoded_numbers, question_hidden, passage_hidden,
                      sequence_output, number_mask, params):
    B, N, H = encoded_numbers.shape
    q = jnp.repeat(question_hidden[:, None, :], N, axis=1)
    p = jnp.repeat(passage_hidden[:, None, :], N, axis=1)
    c = jnp.repeat(sequence_output[:, 0][:, None, :], N, axis=1)
    x = jnp.concatenate([encoded_numbers, q, p, c], axis=-1)
    hid = x @ params["w1"] + params["b1"]
    hid = _gelu(hid)
    mu = hid.mean(-1, keepdims=True)
    var = ((hid - mu) ** 2).mean(-1, keepdims=True)
    hid = (hid - mu) * jax.lax.rsqrt(var + LN_EPS)
    hid = hid * params["gamma"] + params["beta"]
    logits = hid @ params["w2"] + params["b2"]
    logp = jax.nn.log_softmax(logits, axis=-1)
    signs = jnp.argmax(logp, axis=-1).astype(jnp.int32)
    signs = jnp.where(number_mask > 0, signs, -1)
    return logp, signs


if __name__ == "__main__":
    # Config: hidden_size=32, use_heavy_postnet=False -> in_hidden = 4*H = 128
    B, N, S, H = 2, 8, 12, 32
    IN_H = 4 * H

    key = jax.random.PRNGKey(0)
    keys = jax.random.split(key, 10)

    encoded_numbers = jax.random.normal(keys[0], (B, N, H), jnp.float32)
    question_hidden = jax.random.normal(keys[1], (B, H), jnp.float32)
    passage_hidden = jax.random.normal(keys[2], (B, H), jnp.float32)
    sequence_output = jax.random.normal(keys[3], (B, S, H), jnp.float32)
    # batch 0: all numbers valid; batch 1: last 3 numbers masked out
    number_mask = jnp.stack([jnp.ones((N,), jnp.int32),
                             (jnp.arange(N) < N - 3).astype(jnp.int32)], axis=0)

    params = {
        # stored as [in, out] (== PyTorch weight.T); semantics identical
        "w1": 0.1 * jax.random.normal(keys[4], (IN_H, H), jnp.float32),
        "b1": 0.1 * jax.random.normal(keys[5], (H,), jnp.float32),
        "gamma": 1.0 + 0.1 * jax.random.normal(keys[6], (H,), jnp.float32),
        "beta": 0.1 * jax.random.normal(keys[7], (H,), jnp.float32),
        "w2": 0.1 * jax.random.normal(keys[8], (H, 3), jnp.float32),
        "b2": 0.1 * jax.random.normal(keys[9], (3,), jnp.float32),
    }

    ref_lp, ref_signs = reference_forward(
        encoded_numbers, question_hidden, passage_hidden, sequence_output,
        number_mask, params)

    # --- strict check: f32 MXU path (bit-close to the spec forward) ---
    log_probs, best_signs = change_ratio_forward(
        encoded_numbers, question_hidden, passage_hidden, sequence_output,
        number_mask, params, matmul_dtype=jnp.float32)
    jax.block_until_ready((log_probs, best_signs))
    assert log_probs.shape == (B, N, 3) and best_signs.shape == (B, N)
    assert jnp.allclose(log_probs, ref_lp, atol=1e-4, rtol=1e-4), "log_probs mismatch (f32)"
    assert jnp.array_equal(best_signs, ref_signs), "best_signs mismatch (f32)"

    # --- bf16 MXU fast path (v6e/v7x): f32 accumulation, loose tolerance ---
    lp_bf16, signs_bf16 = change_ratio_forward(
        encoded_numbers, question_hidden, passage_hidden, sequence_output,
        number_mask, params, matmul_dtype=jnp.bfloat16)
    jax.block_until_ready((lp_bf16, signs_bf16))
    assert lp_bf16.shape == (B, N, 3) and signs_bf16.shape == (B, N)
    assert bool(jnp.all(jnp.isfinite(lp_bf16)))
    assert jnp.allclose(lp_bf16, ref_lp, atol=5e-2, rtol=5e-2), "log_probs mismatch (bf16)"
    assert bool(jnp.all(jnp.where(number_mask > 0, True, signs_bf16 == -1))), \
        "masked positions must be -1 (bf16)"

    print("KERNEL_OK")
</pallas_src>

<mosaic_0001>
module attributes {stable_mosaic.version = 11 : i64} {
  func.func @change_ratio_kernel(%arg0: i32, %arg1: i32, %arg2: memref<1x8x32xf32, #tpu.memory_space<vmem>>, %arg3: memref<1x1x32xf32, #tpu.memory_space<vmem>>, %arg4: memref<1x8x1xi32, #tpu.memory_space<vmem>>, %arg5: memref<32x32xf32, #tpu.memory_space<vmem>>, %arg6: memref<1x32xf32, #tpu.memory_space<vmem>>, %arg7: memref<1x32xf32, #tpu.memory_space<vmem>>, %arg8: memref<32x128xf32, #tpu.memory_space<vmem>>, %arg9: memref<1x128xf32, #tpu.memory_space<vmem>>, %arg10: memref<1x8x128xf32, #tpu.memory_space<vmem>>) attributes {dimension_semantics = [#tpu.dimension_semantics<parallel>, #tpu.dimension_semantics<parallel>], iteration_bounds = array<i64: 2, 1>, scalar_prefetch = 0 : i64, scratch_operands = 0 : i64, tpu.core_type = #tpu.core_type<tc>, window_params = [{transform_indices = @transform_0, window_bounds = array<i64: 1, 8, 32>}, {transform_indices = @transform_1, window_bounds = array<i64: 1, 1, 32>}, {transform_indices = @transform_2, window_bounds = array<i64: 1, 8, 1>}, {pipeline_mode = #tpu.pipeline_mode<synchronous>, transform_indices = @transform_3, window_bounds = array<i64: 32, 32>}, {pipeline_mode = #tpu.pipeline_mode<synchronous>, transform_indices = @transform_4, window_bounds = array<i64: 1, 32>}, {pipeline_mode = #tpu.pipeline_mode<synchronous>, transform_indices = @transform_5, window_bounds = array<i64: 1, 32>}, {pipeline_mode = #tpu.pipeline_mode<synchronous>, transform_indices = @transform_6, window_bounds = array<i64: 32, 128>}, {pipeline_mode = #tpu.pipeline_mode<synchronous>, transform_indices = @transform_7, window_bounds = array<i64: 1, 128>}, {transform_indices = @transform_8, window_bounds = array<i64: 1, 8, 128>}]} {
    %c0 = arith.constant 0 : index
    %c0_0 = arith.constant 0 : index
    %c0_1 = arith.constant 0 : index
    %0 = vector.load %arg2[%c0, %c0_0, %c0_1] : memref<1x8x32xf32, #tpu.memory_space<vmem>>, vector<1x8x32xf32>
    %1 = vector.shape_cast %0 : vector<1x8x32xf32> to vector<8x32xf32>
    %c0_2 = arith.constant 0 : index
    %c0_3 = arith.constant 0 : index
    %c0_4 = arith.constant 0 : index
    %2 = vector.load %arg3[%c0_2, %c0_3, %c0_4] : memref<1x1x32xf32, #tpu.memory_space<vmem>>, vector<1x1x32xf32>
    %3 = vector.shape_cast %2 : vector<1x1x32xf32> to vector<1x32xf32>
    %c0_5 = arith.constant 0 : index
    %c0_6 = arith.constant 0 : index
    %4 = vector.load %arg5[%c0_5, %c0_6] : memref<32x32xf32, #tpu.memory_space<vmem>>, vector<32x32xf32>
    %cst = arith.constant dense<0.000000e+00> : vector<8x32xf32>
    %5 = tpu.matmul %1, %4, %cst {dimension_numbers = #tpu.dot_dimension_numbers<[1], [0], [0], [1], [0, 0, 1, 1], [], []>} : vector<8x32xf32>, vector<32x32xf32>, vector<8x32xf32> -> vector<8x32xf32>
    %6 = vector.broadcast %3 : vector<1x32xf32> to vector<8x32xf32>
    %7 = arith.addf %5, %6 : vector<8x32xf32>
    %cst_7 = arith.constant 5.000000e-01 : f32
    %8 = vector.broadcast %cst_7 : f32 to vector<8x32xf32>
    %9 = arith.mulf %8, %7 : vector<8x32xf32>
    %cst_8 = arith.constant 0.707106769 : f32
    %10 = vector.broadcast %cst_8 : f32 to vector<8x32xf32>
    %11 = arith.mulf %7, %10 : vector<8x32xf32>
    %cst_9 = arith.constant 0.000000e+00 : f32
    %12 = vector.broadcast %cst_9 : f32 to vector<8x32xf32>
    %13 = arith.cmpf oge, %11, %12 : vector<8x32xf32>
    %cst_10 = arith.constant 1.000000e+00 : f32
    %cst_11 = arith.constant -1.000000e+00 : f32
    %14 = vector.broadcast %cst_10 : f32 to vector<8x32xf32>
    %15 = vector.broadcast %cst_11 : f32 to vector<8x32xf32>
    %16 = arith.select %13, %14, %15 : vector<8x32xi1>, vector<8x32xf32>
    %17 = math.absf %11 : vector<8x32xf32>
    %cst_12 = arith.constant 0.327591091 : f32
    %18 = vector.broadcast %cst_12 : f32 to vector<8x32xf32>
    %19 = arith.mulf %18, %17 : vector<8x32xf32>
    %cst_13 = arith.constant 1.000000e+00 : f32
    %20 = vector.broadcast %cst_13 : f32 to vector<8x32xf32>
    %21 = arith.addf %20, %19 : vector<8x32xf32>
    %cst_14 = arith.constant 1.000000e+00 : f32
    %22 = vector.broadcast %cst_14 : f32 to vector<8x32xf32>
    %23 = arith.divf %22, %21 : vector<8x32xf32>
    %cst_15 = arith.constant 1.06140542 : f32
    %24 = vector.broadcast %cst_15 : f32 to vector<8x32xf32>
    %25 = arith.mulf %24, %23 : vector<8x32xf32>
    %cst_16 = arith.constant -1.45315206 : f32
    %26 = vector.broadcast %cst_16 : f32 to vector<8x32xf32>
    %27 = arith.addf %25, %26 : vector<8x32xf32>
    %28 = arith.mulf %27, %23 : vector<8x32xf32>
    %cst_17 = arith.constant 1.42141378 : f32
    %29 = vector.broadcast %cst_17 : f32 to vector<8x32xf32>
    %30 = arith.addf %28, %29 : vector<8x32xf32>
    %31 = arith.mulf %30, %23 : vector<8x32xf32>
    %cst_18 = arith.constant -0.284496725 : f32
    %32 = vector.broadcast %cst_18 : f32 to vector<8x32xf32>
    %33 = arith.addf %31, %32 : vector<8x32xf32>
    %34 = arith.mulf %33, %23 : vector<8x32xf32>
    %cst_19 = arith.constant 0.254829586 : f32
    %35 = vector.broadcast %cst_19 : f32 to vector<8x32xf32>
    %36 = arith.addf %34, %35 : vector<8x32xf32>
    %37 = arith.mulf %36, %23 : vector<8x32xf32>
    %cst_20 = arith.constant 0.000000e+00 : f32
    %38 = vector.broadcast %cst_20 : f32 to vector<8x32xf32>
    %39 = arith.subf %38, %17 : vector<8x32xf32>
    %40 = arith.mulf %39, %17 : vector<8x32xf32>
    %41 = math.exp %40 : vector<8x32xf32>
    %42 = arith.mulf %37, %41 : vector<8x32xf32>
    %cst_21 = arith.constant 1.000000e+00 : f32
    %43 = vector.broadcast %cst_21 : f32 to vector<8x32xf32>
    %44 = arith.subf %43, %42 : vector<8x32xf32>
    %45 = arith.mulf %16, %44 : vector<8x32xf32>
    %cst_22 = arith.constant 1.000000e+00 : f32
    %46 = vector.broadcast %cst_22 : f32 to vector<8x32xf32>
    %47 = arith.addf %46, %45 : vector<8x32xf32>
    %48 = arith.mulf %9, %47 : vector<8x32xf32>
    %cst_23 = arith.constant dense<0.000000e+00> : vector<8xf32>
    %49 = vector.multi_reduction <add>, %48, %cst_23 [1] : vector<8x32xf32> to vector<8xf32>
    %50 = vector.shape_cast %49 : vector<8xf32> to vector<8x1xf32>
    %51 = arith.mulf %48, %48 : vector<8x32xf32>
    %cst_24 = arith.constant dense<0.000000e+00> : vector<8xf32>
    %52 = vector.multi_reduction <add>, %51, %cst_24 [1] : vector<8x32xf32> to vector<8xf32>
    %53 = vector.shape_cast %52 : vector<8xf32> to vector<8x1xf32>
    %cst_25 = arith.constant 3.125000e-02 : f32
    %54 = vector.broadcast %cst_25 : f32 to vector<8x1xf32>
    %55 = arith.mulf %50, %54 : vector<8x1xf32>
    %cst_26 = arith.constant 3.125000e-02 : f32
    %56 = vector.broadcast %cst_26 : f32 to vector<8x1xf32>
    %57 = arith.mulf %53, %56 : vector<8x1xf32>
    %58 = arith.mulf %55, %55 : vector<8x1xf32>
    %59 = arith.subf %57, %58 : vector<8x1xf32>
    %60 = vector.broadcast %55 : vector<8x1xf32> to vector<8x32xf32>
    %61 = arith.subf %48, %60 : vector<8x32xf32>
    %cst_27 = arith.constant 9.99999974E-6 : f32
    %62 = vector.broadcast %cst_27 : f32 to vector<8x1xf32>
    %63 = arith.addf %59, %62 : vector<8x1xf32>
    %64 = math.rsqrt %63 : vector<8x1xf32>
    %65 = vector.broadcast %64 : vector<8x1xf32> to vector<8x32xf32>
    %66 = arith.mulf %61, %65 : vector<8x32xf32>
    %c0_28 = arith.constant 0 : index
    %c0_29 = arith.constant 0 : index
    %67 = vector.load %arg6[%c0_28, %c0_29] : memref<1x32xf32, #tpu.memory_space<vmem>>, vector<1x32xf32>
    %68 = vector.broadcast %67 : vector<1x32xf32> to vector<8x32xf32>
    %69 = arith.mulf %66, %68 : vector<8x32xf32>
    %c0_30 = arith.constant 0 : index
    %c0_31 = arith.constant 0 : index
    %70 = vector.load %arg7[%c0_30, %c0_31] : memref<1x32xf32, #tpu.memory_space<vmem>>, vector<1x32xf32>
    %71 = vector.broadcast %70 : vector<1x32xf32> to vector<8x32xf32>
    %72 = arith.addf %69, %71 : vector<8x32xf32>
    %c0_32 = arith.constant 0 : index
    %c0_33 = arith.constant 0 : index
    %73 = vector.load %arg8[%c0_32, %c0_33] : memref<32x128xf32, #tpu.memory_space<vmem>>, vector<32x128xf32>
    %cst_34 = arith.constant dense<0.000000e+00> : vector<8x128xf32>
    %74 = tpu.matmul %72, %73, %cst_34 {dimension_numbers = #tpu.dot_dimension_numbers<[1], [0], [0], [1], [0, 0, 1, 1], [], []>} : vector<8x32xf32>, vector<32x128xf32>, vector<8x128xf32> -> vector<8x128xf32>
    %c0_35 = arith.constant 0 : index
    %c0_36 = arith.constant 0 : index
    %75 = vector.load %arg9[%c0_35, %c0_36] : memref<1x128xf32, #tpu.memory_space<vmem>>, vector<1x128xf32>
    %76 = vector.broadcast %75 : vector<1x128xf32> to vector<8x128xf32>
    %77 = arith.addf %74, %76 : vector<8x128xf32>
    %cst_37 = arith.constant dense<0xFF800000> : vector<8xf32>
    %78 = vector.multi_reduction <maximumf>, %77, %cst_37 [1] : vector<8x128xf32> to vector<8xf32>
    %79 = vector.shape_cast %78 : vector<8xf32> to vector<8x1xf32>
    %80 = vector.broadcast %79 : vector<8x1xf32> to vector<8x128xf32>
    %81 = arith.subf %77, %80 : vector<8x128xf32>
    %82 = math.exp %81 : vector<8x128xf32>
    %cst_38 = arith.constant dense<0.000000e+00> : vector<8xf32>
    %83 = vector.multi_reduction <add>, %82, %cst_38 [1] : vector<8x128xf32> to vector<8xf32>
    %84 = vector.shape_cast %83 : vector<8xf32> to vector<8x1xf32>
    %85 = math.log %84 : vector<8x1xf32>
    %86 = vector.broadcast %85 : vector<8x1xf32> to vector<8x128xf32>
    %87 = arith.subf %81, %86 : vector<8x128xf32>
    %88 = tpu.iota {dimensions = array<i32: 1>} : vector<8x128xi32>
    %89 = arith.sitofp %88 : vector<8x128xi32> to vector<8x128xf32>
    %90 = vector.broadcast %79 : vector<8x1xf32> to vector<8x128xf32>
    %91 = arith.cmpf oge, %77, %90 : vector<8x128xf32>
    %cst_39 = arith.constant 1.280000e+02 : f32
    %92 = vector.broadcast %cst_39 : f32 to vector<8x128xf32>
    %93 = arith.select %91, %89, %92 : vector<8x128xi1>, vector<8x128xf32>
    %cst_40 = arith.constant dense<0x7F800000> : vector<8xf32>
    %94 = vector.multi_reduction <minimumf>, %93, %cst_40 [1] : vector<8x128xf32> to vector<8xf32>
    %95 = vector.shape_cast %94 : vector<8xf32> to vector<8x1xf32>
    %c0_41 = arith.constant 0 : index
    %c0_42 = arith.constant 0 : index
    %c0_43 = arith.constant 0 : index
    %96 = vector.load %arg4[%c0_41, %c0_42, %c0_43] : memref<1x8x1xi32, #tpu.memory_space<vmem>>, vector<1x8x1xi32>
    %97 = vector.shape_cast %96 : vector<1x8x1xi32> to vector<8x1xi32>
    %c0_i32 = arith.constant 0 : i32
    %98 = vector.broadcast %c0_i32 : i32 to vector<8x1xi32>
    %99 = arith.cmpi sgt, %97, %98 : vector<8x1xi32>
    %cst_44 = arith.constant -1.000000e+00 : f32
    %100 = vector.broadcast %cst_44 : f32 to vector<8x1xf32>
    %101 = arith.select %99, %95, %100 : vector<8x1xi1>, vector<8x1xf32>
    %c3_i32 = arith.constant 3 : i32
    %102 = vector.broadcast %c3_i32 : i32 to vector<8x128xi32>
    %103 = arith.cmpi eq, %88, %102 : vector<8x128xi32>
    %104 = vector.shape_cast %101 : vector<8x1xf32> to vector<8x1xf32>
    %105 = vector.broadcast %104 : vector<8x1xf32> to vector<8x128xf32>
    %106 = arith.select %103, %105, %87 : vector<8x128xi1>, vector<8x128xf32>
    %c0_45 = arith.constant 0 : index
    %c0_46 = arith.constant 0 : index
    %c0_47 = arith.constant 0 : index
    %107 = vector.load %arg10[%c0_45, %c0_46, %c0_47] : memref<1x8x128xf32, #tpu.memory_space<vmem>>, vector<1x8x128xf32>
    %108 = vector.shape_cast %107 : vector<1x8x128xf32> to vector<8x128xf32>
    %109 = vector.shape_cast %106 : vector<8x128xf32> to vector<1x8x128xf32>
    tpu.vector_store %arg10[%c0_45, %c0_46, %c0_47], %109 {strides = array<i32>} : memref<1x8x128xf32, #tpu.memory_space<vmem>>, vector<1x8x128xf32>,
    return
  }
  func.func @transform_0(%arg0: i32, %arg1: i32) -> (i32, i32, i32) {
    %c0_i32 = arith.constant 0 : i32
    %c0_i32_0 = arith.constant 0 : i32
    return %arg0, %arg1, %c0_i32 : i32, i32, i32
  }
  func.func @transform_1(%arg0: i32, %arg1: i32) -> (i32, i32, i32) {
    %c0_i32 = arith.constant 0 : i32
    %c0_i32_0 = arith.constant 0 : i32
    %c0_i32_1 = arith.constant 0 : i32
    return %arg0, %c0_i32, %c0_i32_0 : i32, i32, i32
  }
  func.func @transform_2(%arg0: i32, %arg1: i32) -> (i32, i32, i32) {
    %c0_i32 = arith.constant 0 : i32
    %c0_i32_0 = arith.constant 0 : i32
    return %arg0, %arg1, %c0_i32 : i32, i32, i32
  }
  func.func @transform_3(%arg0: i32, %arg1: i32) -> (i32, i32) {
    %c0_i32 = arith.constant 0 : i32
    %c0_i32_0 = arith.constant 0 : i32
    %c0_i32_1 = arith.constant 0 : i32
    return %c0_i32, %c0_i32_0 : i32, i32
  }
  func.func @transform_4(%arg0: i32, %arg1: i32) -> (i32, i32) {
    %c0_i32 = arith.constant 0 : i32
    %c0_i32_0 = arith.constant 0 : i32
    %c0_i32_1 = arith.constant 0 : i32
    return %c0_i32, %c0_i32_0 : i32, i32
  }
  func.func @transform_5(%arg0: i32, %arg1: i32) -> (i32, i32) {
    %c0_i32 = arith.constant 0 : i32
    %c0_i32_0 = arith.constant 0 : i32
    %c0_i32_1 = arith.constant 0 : i32
    return %c0_i32, %c0_i32_0 : i32, i32
  }
  func.func @transform_6(%arg0: i32, %arg1: i32) -> (i32, i32) {
    %c0_i32 = arith.constant 0 : i32
    %c0_i32_0 = arith.constant 0 : i32
    %c0_i32_1 = arith.constant 0 : i32
    return %c0_i32, %c0_i32_0 : i32, i32
  }
  func.func @transform_7(%arg0: i32, %arg1: i32) -> (i32, i32) {
    %c0_i32 = arith.constant 0 : i32
    %c0_i32_0 = arith.constant 0 : i32
    %c0_i32_1 = arith.constant 0 : i32
    return %c0_i32, %c0_i32_0 : i32, i32
  }
  func.func @transform_8(%arg0: i32, %arg1: i32) -> (i32, i32, i32) {
    %c0_i32 = arith.constant 0 : i32
    %c0_i32_0 = arith.constant 0 : i32
    return %arg0, %arg1, %c0_i32 : i32, i32, i32
  }
}

</mosaic_0001>

<llo_original>
// kernel: tpu_custom_call.1
$region0: #{tpu_custom_call.1}
  #allocation0 [shape = 'u32[]', space=smem, size = 0x4, offset = 0x4, fixed_abs, tag = 'smem constant byte address 0x4 - core index']
  #allocation1 [shape = 'u32[144,128]{1,0:T(1,128)}', space=vmem, size = 0x12000, scoped, tag = 'internal scratch']
  %s0 = inlined_call_operand.hbm [shape: f32[2,8,32], index: 0, kind: input, shape index: {}]
  %s1 = inlined_call_operand.vmem [shape: f32[2,1,32], index: 1, kind: input, shape index: {}]
  %s2 = inlined_call_operand.vmem [shape: s32[2,8,1], index: 2, kind: input, shape index: {}]
  %s3 = inlined_call_operand.hbm [shape: f32[32,32], index: 3, kind: input, shape index: {}]
  %s4 = inlined_call_operand.vmem [shape: f32[1,32], index: 4, kind: input, shape index: {}]
  %s5 = inlined_call_operand.vmem [shape: f32[1,32], index: 5, kind: input, shape index: {}]
  %s6 = inlined_call_operand.vmem [shape: f32[32,128], index: 6, kind: input, shape index: {}]
  %s7 = inlined_call_operand.vmem [shape: f32[1,128], index: 7, kind: input, shape index: {}]
  %s8 = inlined_call_operand.hbm [shape: f32[2,8,128], index: 8, kind: output, shape index: {}]
  %s9 = sld [smem:[#allocation0]]
  $region73: #{tpu_custom_call.1} parent=0
    _
  %s11 = ssub.s32 1, %s9
  %s12 = scalar_select 0, %s11, %s9
  $region1: #{tpu_custom_call.1} parent=0
    #allocation2 [shape = 'u8[8192]{0}', space=vmem, size = 0x2000, scoped, tag = 'input window, operand 0']
    #allocation3 [shape = 's32[2]{0}', space=sflag, size = 0x8, scoped, tag = 'scoped memory for tpu_custom_call.1']
    #allocation4 [shape = 's32[2]{0}', space=sflag, size = 0x8, scoped, tag = 'scoped memory for tpu_custom_call.1']
    #allocation5 [shape = 'u8[16384]{0}', space=vmem, size = 0x4000, scoped, tag = 'input window, operand 3, single buffered']
    #allocation6 [shape = 's32[1]{0}', space=sflag, size = 0x4, scoped, tag = 'scoped memory for tpu_custom_call.1']
    #allocation7 [shape = 'u8[8192]{0}', space=vmem, size = 0x2000, scoped, tag = 'output window, operand 0']
    %13 = vsyncpa [#allocation3], 0
    %s14 = scalar_lea.sflag [#allocation3], 1
    %15 = vsyncpa %s14, 0
    %16 = vsyncpa [#allocation6], 0
    %17 = vsyncpa [#allocation4], 0
    %s18 = scalar_lea.sflag [#allocation4], 1
    %19 = vsyncpa %s18, 0
    loop: start=0, step=1, limit=4
    $region2: #{tpu_custom_call.1} parent=1 // loop_pre_header
      _
    $region3: #{tpu_custom_call.1} parent=1 // loop_header
      %s21 = sphi 0, %s25
      %p22 = scmp.ge.s32.totalorder %s21, 4
      %s28 = sphi 0, %s40
      %s29 = sphi 0, %s36
      %s30 = sphi 0, %s28
      %s31 = sphi 0, %s29
      %s32 = sphi 0, %s30
      %s33 = sphi 0, %s31
      %s45 = sphi 0, %s47
      %s48 = sphi 0, %s45
      %s49 = sphi 0, %s48
      %s65 = sphi 0, %s49
      %s71 = sphi 0, %s73
      %s74 = sphi 0, %s71
      %s75 = sphi 0, %s74
      %s91 = sphi 0, %s75
      %s99 = sphi 0, %s101
      %s102 = sphi 0, %s99
      %s103 = sphi 0, %s102
      %s119 = sphi 0, %s103
      %s123 = sphi 0, %s123
      %s125 = sphi 0, %s123
      %s126 = sphi 0, %s125
      %s140 = sphi 0, %s126
      %s144 = sphi 0, %s144
      %s146 = sphi 0, %s144
      %s147 = sphi 0, %s146
      %s161 = sphi 0, %s147
      %s165 = sphi 0, %s165
      %s167 = sphi 0, %s165
      %s168 = sphi 0, %s167
      %s182 = sphi 0, %s168
      %s186 = sphi 0, %s186
      %s188 = sphi 0, %s186
      %s189 = sphi 0, %s188
      %s203 = sphi 0, %s189
      %s207 = sphi 0, %s207
      %s209 = sphi 0, %s207
      %s210 = sphi 0, %s209
      %s224 = sphi 0, %s210
      %s232 = sphi 0, %s234
      %s235 = sphi 0, %s232
      %s236 = sphi 0, %s235
      %s252 = sphi 0, %s236
    $region4: #{tpu_custom_call.1} parent=1 // loop_header_branch
      %24 = sbr.rel (%p22) target = $region8
    $region5: #{tpu_custom_call.1} parent=1 // loop_body
      %s26 = ssub.s32 %s21, 1
      %s27 = ssub.s32 %s21, 2
      %s34 = sadd.s32 1, %s29
      %p35 = scmp.ge.s32.totalorder %s34, 1
      %s36 = scalar_select %p35, 0, %s34
      %s37 = sadd.s32 1, %s28
      %s38 = scalar_select %p35, %s37, %s28
      %p39 = scmp.ge.s32.totalorder %s38, 2
      %s40 = scalar_select %p39, 0, %s38
      %s41 = ssub.s32 %s28, %s40
      %s42 = ssub.s32 %s29, %s36
      %s43 = sor.u32 %s41, %s42
      %p44 = scmp.eq.s32.totalorder %s43, 0
      %s46 = sadd.s32 %s45, 1
      %s47 = scalar_select %p44, %s45, %s46
      %p50 = pneg %p44
      %p51 = scmp.eq.s32.totalorder %s21, 1
      %p52 = por %p50, %p51
      %p53 = scmp.ne.s32.totalorder %s45, %s48
      %p54 = scmp.eq.s32.totalorder %s21, 0
      %p55 = por %p53, %p54
      %p56 = scmp.ne.s32.totalorder %s45, %s48
      %p57 = scmp.eq.s32.totalorder %s26, 1
      %p58 = por %p56, %p57
      %p59 = scmp.ne.s32.totalorder %s48, %s49
      %p60 = scmp.eq.s32.totalorder %s26, 0
      %p61 = por %p59, %p60
      %p62 = scmp.ne.s32.totalorder %s48, %s49
      %p63 = scmp.eq.s32.totalorder %s27, 1
      %p64 = por %p62, %p63
      %p66 = scmp.ne.s32.totalorder %s49, %s65
      %p67 = scmp.eq.s32.totalorder %s27, 0
      %p68 = por %p66, %p67
      %s69 = ssub.s32 %s28, %s40
      %p70 = scmp.eq.s32.totalorder %s69, 0
      %s72 = sadd.s32 %s71, 1
      %s73 = scalar_select %p70, %s71, %s72
      %p76 = pneg %p70
      %p77 = scmp.eq.s32.totalorder %s21, 1
      %p78 = por %p76, %p77
      %p79 = scmp.ne.s32.totalorder %s71, %s74
      %p80 = scmp.eq.s32.totalorder %s21, 0
      %p81 = por %p79, %p80
      %p82 = scmp.ne.s32.totalorder %s71, %s74
      %p83 = scmp.eq.s32.totalorder %s26, 1
      %p84 = por %p82, %p83
      %p85 = scmp.ne.s32.totalorder %s74, %s75
      %p86 = scmp.eq.s32.totalorder %s26, 0
      %p87 = por %p85, %p86
      %p88 = scmp.ne.s32.totalorder %s74, %s75
      %p89 = scmp.eq.s32.totalorder %s27, 1
      %p90 = por %p88, %p89
      %p92 = scmp.ne.s32.totalorder %s75, %s91
      %p93 = scmp.eq.s32.totalorder %s27, 0
      %p94 = por %p92, %p93
      %s95 = ssub.s32 %s28, %s40
      %s96 = ssub.s32 %s29, %s36
      %s97 = sor.u32 %s95, %s96
      %p98 = scmp.eq.s32.totalorder %s97, 0
      %s100 = sadd.s32 %s99, 1
      %s101 = scalar_select %p98, %s99, %s100
      %p104 = pneg %p98
      %p105 = scmp.eq.s32.totalorder %s21, 1
      %p106 = por %p104, %p105
      %p107 = scmp.ne.s32.totalorder %s99, %s102
      %p108 = scmp.eq.s32.totalorder %s21, 0
      %p109 = por %p107, %p108
      %p110 = scmp.ne.s32.totalorder %s99, %s102
      %p111 = scmp.eq.s32.totalorder %s26, 1
      %p112 = por %p110, %p111
      %p113 = scmp.ne.s32.totalorder %s102, %s103
      %p114 = scmp.eq.s32.totalorder %s26, 0
      %p115 = por %p113, %p114
      %p116 = scmp.ne.s32.totalorder %s102, %s103
      %p117 = scmp.eq.s32.totalorder %s27, 1
      %p118 = por %p116, %p117
      %p120 = scmp.ne.s32.totalorder %s103, %s119
      %p121 = scmp.eq.s32.totalorder %s27, 0
      %p122 = por %p120, %p121
      %s124 = sadd.s32 %s123, 1
      %p127 = scmp.eq.s32.totalorder %s21, 1
      %p128 = scmp.ne.s32.totalorder %s123, %s125
      %p129 = scmp.eq.s32.totalorder %s21, 0
      %p130 = por %p128, %p129
      %p131 = scmp.ne.s32.totalorder %s123, %s125
      %p132 = scmp.eq.s32.totalorder %s26, 1
      %p133 = por %p131, %p132
      %p134 = scmp.ne.s32.totalorder %s125, %s126
      %p135 = scmp.eq.s32.totalorder %s26, 0
      %p136 = por %p134, %p135
      %p137 = scmp.ne.s32.totalorder %s125, %s126
      %p138 = scmp.eq.s32.totalorder %s27, 1
      %p139 = por %p137, %p138
      %p141 = scmp.ne.s32.totalorder %s126, %s140
      %p142 = scmp.eq.s32.totalorder %s27, 0
      %p143 = por %p141, %p142
      %s145 = sadd.s32 %s144, 1
      %p148 = scmp.eq.s32.totalorder %s21, 1
      %p149 = scmp.ne.s32.totalorder %s144, %s146
      %p150 = scmp.eq.s32.totalorder %s21, 0
      %p151 = por %p149, %p150
      %p152 = scmp.ne.s32.totalorder %s144, %s146
      %p153 = scmp.eq.s32.totalorder %s26, 1
      %p154 = por %p152, %p153
      %p155 = scmp.ne.s32.totalorder %s146, %s147
      %p156 = scmp.eq.s32.totalorder %s26, 0
      %p157 = por %p155, %p156
      %p158 = scmp.ne.s32.totalorder %s146, %s147
      %p159 = scmp.eq.s32.totalorder %s27, 1
      %p160 = por %p158, %p159
      %p162 = scmp.ne.s32.totalorder %s147, %s161
      %p163 = scmp.eq.s32.totalorder %s27, 0
      %p164 = por %p162, %p163
      %s166 = sadd.s32 %s165, 1
      %p169 = scmp.eq.s32.totalorder %s21, 1
      %p170 = scmp.ne.s32.totalorder %s165, %s167
      %p171 = scmp.eq.s32.totalorder %s21, 0
      %p172 = por %p170, %p171
      %p173 = scmp.ne.s32.totalorder %s165, %s167
      %p174 = scmp.eq.s32.totalorder %s26, 1
      %p175 = por %p173, %p174
      %p176 = scmp.ne.s32.totalorder %s167, %s168
      %p177 = scmp.eq.s32.totalorder %s26, 0
      %p178 = por %p176, %p177
      %p179 = scmp.ne.s32.totalorder %s167, %s168
      %p180 = scmp.eq.s32.totalorder %s27, 1
      %p181 = por %p179, %p180
      %p183 = scmp.ne.s32.totalorder %s168, %s182
      %p184 = scmp.eq.s32.totalorder %s27, 0
      %p185 = por %p183, %p184
      %s187 = sadd.s32 %s186, 1
      %p190 = scmp.eq.s32.totalorder %s21, 1
      %p191 = scmp.ne.s32.totalorder %s186, %s188
      %p192 = scmp.eq.s32.totalorder %s21, 0
      %p193 = por %p191, %p192
      %p194 = scmp.ne.s32.totalorder %s186, %s188
      %p195 = scmp.eq.s32.totalorder %s26, 1
      %p196 = por %p194, %p195
      %p197 = scmp.ne.s32.totalorder %s188, %s189
      %p198 = scmp.eq.s32.totalorder %s26, 0
      %p199 = por %p197, %p198
      %p200 = scmp.ne.s32.totalorder %s188, %s189
      %p201 = scmp.eq.s32.totalorder %s27, 1
      %p202 = por %p200, %p201
      %p204 = scmp.ne.s32.totalorder %s189, %s203
      %p205 = scmp.eq.s32.totalorder %s27, 0
      %p206 = por %p204, %p205
      %s208 = sadd.s32 %s207, 1
      %p211 = scmp.eq.s32.totalorder %s21, 1
      %p212 = scmp.ne.s32.totalorder %s207, %s209
      %p213 = scmp.eq.s32.totalorder %s21, 0
      %p214 = por %p212, %p213
      %p215 = scmp.ne.s32.totalorder %s207, %s209
      %p216 = scmp.eq.s32.totalorder %s26, 1
      %p217 = por %p215, %p216
      %p218 = scmp.ne.s32.totalorder %s209, %s210
      %p219 = scmp.eq.s32.totalorder %s26, 0
      %p220 = por %p218, %p219
      %p221 = scmp.ne.s32.totalorder %s209, %s210
      %p222 = scmp.eq.s32.totalorder %s27, 1
      %p223 = por %p221, %p222
      %p225 = scmp.ne.s32.totalorder %s210, %s224
      %p226 = scmp.eq.s32.totalorder %s27, 0
      %p227 = por %p225, %p226
      %s228 = ssub.s32 %s28, %s40
      %s229 = ssub.s32 %s29, %s36
      %s230 = sor.u32 %s228, %s229
      %p231 = scmp.eq.s32.totalorder %s230, 0
      %s233 = sadd.s32 %s232, 1
      %s234 = scalar_select %p231, %s232, %s233
      %p237 = pneg %p231
      %p238 = scmp.eq.s32.totalorder %s21, 1
      %p239 = por %p237, %p238
      %p240 = scmp.ne.s32.totalorder %s232, %s235
      %p241 = scmp.eq.s32.totalorder %s21, 0
      %p242 = por %p240, %p241
      %p243 = scmp.ne.s32.totalorder %s232, %s235
      %p244 = scmp.eq.s32.totalorder %s26, 1
      %p245 = por %p243, %p244
      %p246 = scmp.ne.s32.totalorder %s235, %s236
      %p247 = scmp.eq.s32.totalorder %s26, 0
      %p248 = por %p246, %p247
      %p249 = scmp.ne.s32.totalorder %s235, %s236
      %p250 = scmp.eq.s32.totalorder %s27, 1
      %p251 = por %p249, %p250
      %p253 = scmp.ne.s32.totalorder %s236, %s252
      %p254 = scmp.eq.s32.totalorder %s27, 0
      %p255 = por %p253, %p254
      %p256 = scmp.le.s32.totalorder 1, %s21
      %p257 = scmp.lt.s32.totalorder %s21, 3
      %p258 = pnand %p256, %p257
      %p259 = pneg %p258
      // Predicated region
      $region9: #{tpu_custom_call.1} parent=5 // pred_check
        _
      $region10: #{tpu_custom_call.1} parent=5 // pred_check_branch
        %261 = sbr.rel (%p258) target = $region12
      $region11: #{tpu_custom_call.1} parent=5 // pred_region
        %s262 = ssub.s32 %s21, 1
        // Predicated region
        $region13: #{tpu_custom_call.1} parent=11 // pred_check
          %p263 = pneg %p136
        $region14: #{tpu_custom_call.1} parent=11 // pred_check_branch
          %265 = sbr.rel (%p263) target = $region16
        $region15: #{tpu_custom_call.1} parent=11 // pred_region
          %s267 = ssub.s32 512, 512
          %268 = vsyncadd [#allocation6], %s267
          %s269 = sshll.u32 [#allocation5], 4
          %s270 = int_to_ptr.vmem [resolvable:$true] %s269
          %275 = dma.hbm_to_vmem [thread:$0]  %s3, 512, %s270, [#allocation6], 128, 128, 8
        $region16: #{tpu_custom_call.1} parent=11 // pred_fallthru
          _
        // Predicated region
        $region17: #{tpu_custom_call.1} parent=11 // pred_check
          %p276 = pneg %p157
        $region18: #{tpu_custom_call.1} parent=11 // pred_check_branch
          %278 = sbr.rel (%p276) target = $region20
        $region19: #{tpu_custom_call.1} parent=11 // pred_region
          _
        $region20: #{tpu_custom_call.1} parent=11 // pred_fallthru
          _
        // Predicated region
        $region21: #{tpu_custom_call.1} parent=11 // pred_check
          %p279 = pneg %p178
        $region22: #{tpu_custom_call.1} parent=11 // pred_check_branch
          %281 = sbr.rel (%p279) target = $region24
        $region23: #{tpu_custom_call.1} parent=11 // pred_region
          _
        $region24: #{tpu_custom_call.1} parent=11 // pred_fallthru
          _
        // Predicated region
        $region25: #{tpu_custom_call.1} parent=11 // pred_check
          %p282 = pneg %p199
        $region26: #{tpu_custom_call.1} parent=11 // pred_check_branch
          %284 = sbr.rel (%p282) target = $region28
        $region27: #{tpu_custom_call.1} parent=11 // pred_region
          _
        $region28: #{tpu_custom_call.1} parent=11 // pred_fallthru
          _
        // Predicated region
        $region29: #{tpu_custom_call.1} parent=11 // pred_check
          %p285 = pneg %p220
        $region30: #{tpu_custom_call.1} parent=11 // pred_check_branch
          %287 = sbr.rel (%p285) target = $region32
        $region31: #{tpu_custom_call.1} parent=11 // pred_region
          _
        $region32: #{tpu_custom_call.1} parent=11 // pred_fallthru
          _
      $region12: #{tpu_custom_call.1} parent=5 // pred_fallthru
        _
      %p288 = scmp.lt.s32.totalorder %s21, 2
      // Predicated region
      $region33: #{tpu_custom_call.1} parent=5 // pred_check
        %p289 = pneg %p288
      $region34: #{tpu_custom_call.1} parent=5 // pred_check_branch
        %291 = sbr.rel (%p289) target = $region36
      $region35: #{tpu_custom_call.1} parent=5 // pred_region
        // Predicated region
        $region37: #{tpu_custom_call.1} parent=35 // pred_check
          %p292 = pneg %p55
        $region38: #{tpu_custom_call.1} parent=35 // pred_check_branch
          %294 = sbr.rel (%p292) target = $region40
        $region39: #{tpu_custom_call.1} parent=35 // pred_region
          %s295 = sand.u32 %s45, 1
          %s296 = scalar_lea.sflag [#allocation3], %s295
          %s297 = sand.u32 %s45, 1
          %s298 = smul.addr %s297, 8
          %s299 = scalar_lea.vmem [#allocation2], %s298
          %s301 = ssub.s32 128, 128
          %302 = vsyncadd %s296, %s301
          %s303 = sadd.s32 %s29, %s28
          %s304 = smul.addr %s303, 128
          %s305 = scalar_lea.hbm %s0, %s304
          %s307 = sshll.u32 %s299, 4
          %s308 = int_to_ptr.vmem [resolvable:$true] %s307
          %310 = dma.hbm_to_vmem [thread:$0]  %s305, 128, %s308, %s296
        $region40: #{tpu_custom_call.1} parent=35 // pred_fallthru
          _
        // Predicated region
        $region41: #{tpu_custom_call.1} parent=35 // pred_check
          %p311 = pneg %p81
        $region42: #{tpu_custom_call.1} parent=35 // pred_check_branch
          %313 = sbr.rel (%p311) target = $region44
        $region43: #{tpu_custom_call.1} parent=35 // pred_region
          %p314 = scmp.lt.s32.totalorder %s28, 1
          %s315 = scalar_select %p314, %s28, 1
          %s316 = scalar_lea.vmem %s1, %s315
        $region44: #{tpu_custom_call.1} parent=35 // pred_fallthru
          _
        // Predicated region
        $region45: #{tpu_custom_call.1} parent=35 // pred_check
          %p317 = pneg %p109
        $region46: #{tpu_custom_call.1} parent=35 // pred_check_branch
          %319 = sbr.rel (%p317) target = $region48
        $region47: #{tpu_custom_call.1} parent=35 // pred_region
          %p320 = scmp.lt.s32.totalorder %s28, 1
          %s321 = scalar_select %p320, %s28, 1
          %p322 = scmp.lt.s32.totalorder %s29, 0
          %s323 = scalar_select %p322, %s29, 0
          %s324 = sadd.s32 %s323, %s321
          %s325 = smul.addr %s324, 8
          %s326 = scalar_lea.vmem %s2, %s325
        $region48: #{tpu_custom_call.1} parent=35 // pred_fallthru
          _
      $region36: #{tpu_custom_call.1} parent=5 // pred_fallthru
        _
      %p327 = scmp.le.s32.totalorder 1, %s21
      %p328 = scmp.lt.s32.totalorder %s21, 3
      %p329 = pnand %p327, %p328
      %p330 = pneg %p329
      // Predicated region
      $region49: #{tpu_custom_call.1} parent=5 // pred_check
        _
      $region50: #{tpu_custom_call.1} parent=5 // pred_check_branch
        %332 = sbr.rel (%p329) target = $region52
      $region51: #{tpu_custom_call.1} parent=5 // pred_region
        %s333 = ssub.s32 %s21, 1
        %s334 = sand.u32 %s48, 1
        %s335 = scalar_lea.sflag [#allocation3], %s334
        %s336 = sand.u32 %s48, 1
        %s337 = smul.addr %s336, 8
        %s338 = scalar_lea.vmem [#allocation2], %s337
        // Predicated region
        $region53: #{tpu_custom_call.1} parent=51 // pred_check
          %p339 = pneg %p61
        $region54: #{tpu_custom_call.1} parent=51 // pred_check_branch
          %341 = sbr.rel (%p339) target = $region56
        $region55: #{tpu_custom_call.1} parent=51 // pred_region
          %342 = dma.done %s335, 128
        $region56: #{tpu_custom_call.1} parent=51 // pred_fallthru
          _
        // Predicated region
        $region57: #{tpu_custom_call.1} parent=51 // pred_check
          %p343 = pneg %p136
        $region58: #{tpu_custom_call.1} parent=51 // pred_check_branch
          %345 = sbr.rel (%p343) target = $region60
        $region59: #{tpu_custom_call.1} parent=51 // pred_region
          %346 = dma.done [#allocation6], 512
        $region60: #{tpu_custom_call.1} parent=51 // pred_fallthru
          _
        %s347 = sand.u32 %s48, 1
        %s348 = scalar_lea.sflag [#allocation3], %s347
        %s349 = sand.u32 %s48, 1
        %s350 = smul.addr %s349, 8
        %s351 = scalar_lea.vmem [#allocation2], %s350
        %p352 = pneg %p61
        %p353 = pneg %p58
        %p354 = scmp.lt.s32.totalorder %s30, 1
        %s355 = scalar_select %p354, %s30, 1
        %s356 = scalar_lea.vmem %s1, %s355
        %p357 = pneg %p87
        %p358 = pneg %p84
        %p359 = scmp.lt.s32.totalorder %s30, 1
        %s360 = scalar_select %p359, %s30, 1
        %p361 = scmp.lt.s32.totalorder %s31, 0
        %s362 = scalar_select %p361, %s31, 0
        %s363 = sadd.s32 %s362, %s360
        %s364 = smul.addr %s363, 8
        %s365 = scalar_lea.vmem %s2, %s364
        %p366 = pneg %p115
        %p367 = pneg %p112
        %p368 = pneg %p136
        %p369 = pneg %p133
        %p370 = pneg %p157
        %p371 = pneg %p154
        %p372 = pneg %p178
        %p373 = pneg %p175
        %p374 = pneg %p199
        %p375 = pneg %p196
        %p376 = pneg %p220
        %p377 = pneg %p217
        %p378 = pneg %p248
        %p379 = pneg %p245
        %s380 = sand.u32 %s235, 1
        %s381 = scalar_lea.sflag [#allocation4], %s380
        %s382 = sand.u32 %s235, 1
        %s383 = smul.addr %s382, 8
        %s384 = scalar_lea.vmem [#allocation7], %s383
        %p385 = scmp.lt.s32.totalorder %s30, 1
        %s386 = scalar_select %p385, %s30, 1
        %s387 = scalar_lea.vmem %s1, %s386
        %p388 = scmp.lt.s32.totalorder %s30, 1
        %s389 = scalar_select %p388, %s30, 1
        %p390 = scmp.lt.s32.totalorder %s31, 0
        %s391 = scalar_select %p390, %s31, 0
        %s392 = sadd.s32 %s391, %s389
        %s393 = smul.addr %s392, 8
        %s394 = scalar_lea.vmem %s2, %s393
        %v395 = vld [vmem:[%s338] sm:$0xff]
        %v396 = vld [vmem:[%s387] sm:$0x1]
        %v397 = vld [vmem:[#allocation5] sm:$0xff]
        %v398 = vld [vmem:[#allocation5 + $0x8] sm:$0xff]
        %v399 = vld [vmem:[#allocation5 + $0x10] sm:$0xff]
        %v400 = vld [vmem:[#allocation5 + $0x18] sm:$0xff]
        %v402 = vlaneseq
        %v403 = vshrl.u32 %v402, 7
        %v404 = vsub.s32 0, %v403
        %v405 = vrot.slane %v396, %v404
        %vm407 = vcmask 261120
        %v409 = vsel %vm407, %v395, 0
        %411 = vmatprep.subr.mxu0 0.0
        %412 = vmatpush1.msra.mxu0 %v397
        %413 = vmatprep.subr.mxu0 0.0
        %414 = vmatpush1.msra.mxu0 %v398
        %415 = vmatprep.subr.mxu0 0.0
        %416 = vmatpush1.msra.mxu0 %v399
        %417 = vmatprep.subr.mxu0 0.0
        %418 = vmatpush1.msra.mxu0 %v400
        %419 = vmatprep.subr.mxu0 0.0
        %420 = vmatpush1.msra.mxu0 0.0
        %421 = vmatprep.subr.mxu0 0.0
        %422 = vmatpush1.msra.mxu0 0.0
        %423 = vmatprep.subr.mxu0 0.0
        %424 = vmatpush1.msra.mxu0 0.0
        %425 = vmatprep.subr.mxu0 0.0
        %426 = vmatpush1.msra.mxu0 0.0
        %427 = vmatprep.subr.mxu0 0.0
        %428 = vmatpush1.msra.mxu0 0.0
        %429 = vmatprep.subr.mxu0 0.0
        %430 = vmatpush1.msra.mxu0 0.0
        %431 = vmatprep.subr.mxu0 0.0
        %432 = vmatpush1.msra.mxu0 0.0
        %433 = vmatprep.subr.mxu0 0.0
        %434 = vmatpush1.msra.mxu0 0.0
        %435 = vmatprep.subr.mxu0 0.0
        %436 = vmatpush1.msra.mxu0 0.0
        %437 = vmatprep.subr.mxu0 0.0
        %438 = vmatpush1.msra.mxu0 0.0
        %439 = vmatprep.subr.mxu0 0.0
        %440 = vmatpush1.msra.mxu0 0.0
        %441 = vmatprep.subr.mxu0 0.0
        %442 = vmatpush1.msra.mxu0 0.0
        %443 = vmatprep.subr.mxu0 0.0
        %444 = vmatpush1.msra.mxu0 0.0
        %445 = vmatprep.subr.mxu0 0.0
        %446 = vmatpush1.msra.mxu0 0.0
        %447 = vmatprep.subr.mxu0 0.0
        %448 = vmatpush1.msra.mxu0 0.0
        %449 = vmatprep.subr.mxu0 0.0
        %450 = vmatpush1.msra.mxu0 0.0
        %451 = vmatprep.subr.mxu0 0.0
        %452 = vmatpush1.msra.mxu0 0.0
        %453 = vmatprep.subr.mxu0 0.0
        %454 = vmatpush1.msra.mxu0 0.0
        %455 = vmatprep.subr.mxu0 0.0
        %456 = vmatpush1.msra.mxu0 0.0
        %457 = vmatprep.subr.mxu0 0.0
        %458 = vmatpush1.msra.mxu0 0.0
        %459 = vmatprep.subr.mxu0 0.0
        %460 = vmatpush1.msra.mxu0 0.0
        %461 = vmatprep.subr.mxu0 0.0
        %462 = vmatpush1.msra.mxu0 0.0
        %463 = vmatprep.subr.mxu0 0.0
        %464 = vmatpush1.msra.mxu0 0.0
        %465 = vmatprep.subr.mxu0 0.0
        %466 = vmatpush1.msra.mxu0 0.0
        %467 = vmatprep.subr.mxu0 0.0
        %468 = vmatpush1.msra.mxu0 0.0
        %469 = vmatprep.subr.mxu0 0.0
        %470 = vmatpush1.msra.mxu0 0.0
        %471 = vmatprep.subr.mxu0 0.0
        %472 = vmatpush1.msra.mxu0 0.0
        %473 = vmatprep.subr.mxu0 0.0
        %474 = vmatpush1.msra.mxu0 0.0
        %475 = vmatprep.mubr.f32.mxu0 0.0
        %476 = vmatmul.mubr.f32.gmra.mrb[0].mxu0 %v409
        %v477 = vpop.f32.mrb[0].mxu0
        %v478 = vadd.f32 %v405, %v477
        %v479 = vpop.f32.mrb[0].mxu0
        %480 = vdwg.mxu0
        %v481 = vmul.f32 %v478, 0.5
        %v482 = vmul.f32 %v478, 0.70710677
        %vm483 = vcmp.ge.f32.partialorder %v482, 0.0
        %v484 = vsel %vm483, 1.0, -1.0
        %v485 = vand.u32 2147483647, %v482
        %v486 = vmul.f32 %v485, 0.3275911
        %v487 = vadd.f32 %v486, 1.0
        %v488 = vrcp.pop %v487
        %v489 = vmul.f32 1.0, %v488
        %v490 = vmul.f32 %v489, 1.0614054
        %v491 = vadd.f32 %v490, -1.4531521
        %v492 = vmul.f32 %v491, %v489
        %v493 = vadd.f32 %v492, 1.4214138
        %v494 = vmul.f32 %v493, %v489
        %v495 = vadd.f32 %v494, -0.28449672
        %v496 = vmul.f32 %v495, %v489
        %v497 = vadd.f32 %v496, 0.2548296
        %v498 = vmul.f32 %v497, %v489
        %v499 = vsub.f32 0.0, %v485
        %v500 = vmul.f32 %v499, %v485
        %v501 = vmul.f32 %v500, 1.442695
        %v502 = vpow.pop %v501
        %v503 = vmul.f32 %v498, %v502
        %v504 = vsub.f32 1.0, %v503
        %v505 = vmul.f32 %v484, %v504
        %v506 = vadd.f32 %v505, 1.0
        %v507 = vmul.f32 %v481, %v506
        %v508 = vsel %vm407, %v507, 0.0
        %509 = vadd.xlane.f32.xlu0 %v508
        %v510 = vpop.xlane.xlu0 %509
        %v511 = vmul.f32 %v507, %v507
        %v512 = vsel %vm407, %v511, 0.0
        %513 = vadd.xlane.f32.xlu0 %v512
        %v514 = vpop.xlane.xlu0 %513
        %v515 = vmul.f32 %v510, 0.03125
        %v516 = vmul.f32 %v514, 0.03125
        %v517 = vmul.f32 %v515, %v515
        %v518 = vsub.f32 %v516, %v517
        %v519 = vsub.f32 %v507, %v515
        %v520 = vadd.f32 %v518, 1e-05
        %v521 = vrsqrt.pop %v520
        %v522 = vmul.f32 %v519, %v521
        %v523 = vld [vmem:[%s4] sm:$0x1]
        %v525 = vlaneseq
        %v526 = vshrl.u32 %v525, 7
        %v527 = vsub.s32 0, %v526
        %v528 = vrot.slane %v523, %v527
        %v530 = vmul.f32 %v522, %v528
        %v531 = vld [vmem:[%s5] sm:$0x1]
        %v533 = vlaneseq
        %v534 = vshrl.u32 %v533, 7
        %v535 = vsub.s32 0, %v534
        %v536 = vrot.slane %v531, %v535
        %v538 = vadd.f32 %v530, %v536
        %v539 = vld [vmem:[%s6] sm:$0xff]
        %v540 = vld [vmem:[%s6 + $0x8] sm:$0xff]
        %v541 = vld [vmem:[%s6 + $0x10] sm:$0xff]
        %v542 = vld [vmem:[%s6 + $0x18] sm:$0xff]
        %v543 = vld [vmem:[%s7] sm:$0x1]
        %v545 = vlaneseq
        %v546 = vshrl.u32 %v545, 7
        %v547 = vsub.s32 0, %v546
        %v548 = vrot.slane %v543, %v547
        %v551 = vsel %vm407, %v538, 0
        %553 = vmatprep.subr.mxu0 0.0
        %554 = vmatpush1.msra.mxu0 %v539
        %555 = vmatprep.subr.mxu0 0.0
        %556 = vmatpush1.msra.mxu0 %v540
        %557 = vmatprep.subr.mxu0 0.0
        %558 = vmatpush1.msra.mxu0 %v541
        %559 = vmatprep.subr.mxu0 0.0
        %560 = vmatpush1.msra.mxu0 %v542
        %561 = vmatprep.subr.mxu0 0.0
        %562 = vmatpush1.msra.mxu0 0.0
        %563 = vmatprep.subr.mxu0 0.0
        %564 = vmatpush1.msra.mxu0 0.0
        %565 = vmatprep.subr.mxu0 0.0
        %566 = vmatpush1.msra.mxu0 0.0
        %567 = vmatprep.subr.mxu0 0.0
        %568 = vmatpush1.msra.mxu0 0.0
        %569 = vmatprep.subr.mxu0 0.0
        %570 = vmatpush1.msra.mxu0 0.0
        %571 = vmatprep.subr.mxu0 0.0
        %572 = vmatpush1.msra.mxu0 0.0
        %573 = vmatprep.subr.mxu0 0.0
        %574 = vmatpush1.msra.mxu0 0.0
        %575 = vmatprep.subr.mxu0 0.0
        %576 = vmatpush1.msra.mxu0 0.0
        %577 = vmatprep.subr.mxu0 0.0
        %578 = vmatpush1.msra.mxu0 0.0
        %579 = vmatprep.subr.mxu0 0.0
        %580 = vmatpush1.msra.mxu0 0.0
        %581 = vmatprep.subr.mxu0 0.0
        %582 = vmatpush1.msra.mxu0 0.0
        %583 = vmatprep.subr.mxu0 0.0
        %584 = vmatpush1.msra.mxu0 0.0
        %585 = vmatprep.subr.mxu0 0.0
        %586 = vmatpush1.msra.mxu0 0.0
        %587 = vmatprep.subr.mxu0 0.0
        %588 = vmatpush1.msra.mxu0 0.0
        %589 = vmatprep.subr.mxu0 0.0
        %590 = vmatpush1.msra.mxu0 0.0
        %591 = vmatprep.subr.mxu0 0.0
        %592 = vmatpush1.msra.mxu0 0.0
        %593 = vmatprep.subr.mxu0 0.0
        %594 = vmatpush1.msra.mxu0 0.0
        %595 = vmatprep.subr.mxu0 0.0
        %596 = vmatpush1.msra.mxu0 0.0
        %597 = vmatprep.subr.mxu0 0.0
        %598 = vmatpush1.msra.mxu0 0.0
        %599 = vmatprep.subr.mxu0 0.0
        %600 = vmatpush1.msra.mxu0 0.0
        %601 = vmatprep.subr.mxu0 0.0
        %602 = vmatpush1.msra.mxu0 0.0
        %603 = vmatprep.subr.mxu0 0.0
        %604 = vmatpush1.msra.mxu0 0.0
        %605 = vmatprep.subr.mxu0 0.0
        %606 = vmatpush1.msra.mxu0 0.0
        %607 = vmatprep.subr.mxu0 0.0
        %608 = vmatpush1.msra.mxu0 0.0
        %609 = vmatprep.subr.mxu0 0.0
        %610 = vmatpush1.msra.mxu0 0.0
        %611 = vmatprep.subr.mxu0 0.0
        %612 = vmatpush1.msra.mxu0 0.0
        %613 = vmatprep.subr.mxu0 0.0
        %614 = vmatpush1.msra.mxu0 0.0
        %615 = vmatprep.subr.mxu0 0.0
        %616 = vmatpush1.msra.mxu0 0.0
        %617 = vmatprep.mubr.f32.mxu0 0.0
        %618 = vmatmul.mubr.f32.gmra.mrb[0].mxu0 %v551
        %v619 = vpop.f32.mrb[0].mxu0
        %v620 = vadd.f32 %v548, %v619
        %v621 = vpop.f32.mrb[0].mxu0
        %622 = vdwg.mxu0
        %623 = vmax.xlane.f32.xlu0 %v620
        %v624 = vpop.xlane.xlu0 %623
        %v625 = vsub.f32 %v620, %v624
        %v626 = vmul.f32 %v625, 1.442695
        %v627 = vpow.pop %v626
        %628 = vadd.xlane.f32.xlu0 %v627
        %v629 = vpop.xlane.xlu0 %628
        %v630 = vlog2.pop %v629
        %v631 = vmul.f32 %v630, 0.6931472
        %v632 = vsub.f32 %v625, %v631
        %v633 = vlaneseq
        %v634 = vand.u32 %v633, 127
        %v635 = vcvt.s32.f32 %v634
        %vm636 = vcmp.ge.f32.partialorder %v620, %v624
        %v637 = vsel %vm636, %v635, 128.0
        %638 = vmin.xlane.f32.xlu0 %v637
        %v639 = vpop.xlane.xlu0 %638
        %v640 = vld [vmem:[%s394] sm:$0xff]
        %vm641 = vcmp.gt.s32.totalorder %v640, 0
        %v642 = vsel %vm641, %v639, -1.0
        %vm643 = vcmp.eq.s32.totalorder %v634, 3
        %645 = vset.pattern.permute.xlu0 0
        %646 = vperm.xlu0 %645, %v642
        %v647 = vpop.permute.xlu0 %646
        %v649 = vsel %vm643, %v647, %v632
        %650 = vst [vmem:[%s384] sm:$0xff] %v649
        %s651 = sand.u32 %s235, 1
        %s652 = scalar_lea.sflag [#allocation4], %s651
        %s653 = sand.u32 %s235, 1
        %s654 = smul.addr %s653, 8
        %s655 = scalar_lea.vmem [#allocation7], %s654
        // Predicated region
        $region61: #{tpu_custom_call.1} parent=51 // pred_check
          %p656 = pneg %p245
        $region62: #{tpu_custom_call.1} parent=51 // pred_check_branch
          %658 = sbr.rel (%p656) target = $region64
        $region63: #{tpu_custom_call.1} parent=51 // pred_region
          %s660 = ssub.s32 128, 128
          %661 = vsyncadd %s652, %s660
          %s662 = sadd.s32 %s31, %s30
          %s663 = smul.addr %s662, 128
          %s664 = scalar_lea.hbm %s8, %s663
          %s666 = sshll.u32 %s655, 4
          %s667 = int_to_ptr.vmem [resolvable:$true] %s666
          %669 = dma.vmem_to_hbm [thread:$0]  %s667, 128, %s664, %s652
        $region64: #{tpu_custom_call.1} parent=51 // pred_fallthru
          _
      $region52: #{tpu_custom_call.1} parent=5 // pred_fallthru
        _
      %p670 = scmp.le.s32.totalorder 2, %s21
      // Predicated region
      $region65: #{tpu_custom_call.1} parent=5 // pred_check
        %p671 = pneg %p670
      $region66: #{tpu_custom_call.1} parent=5 // pred_check_branch
        %673 = sbr.rel (%p671) target = $region68
      $region67: #{tpu_custom_call.1} parent=5 // pred_region
        %s674 = ssub.s32 %s21, 2
        // Predicated region
        $region69: #{tpu_custom_call.1} parent=67 // pred_check
          %p675 = pneg %p251
        $region70: #{tpu_custom_call.1} parent=67 // pred_check_branch
          %677 = sbr.rel (%p675) target = $region72
        $region71: #{tpu_custom_call.1} parent=67 // pred_region
          %s678 = sand.u32 %s236, 1
          %s679 = scalar_lea.sflag [#allocation4], %s678
          %s680 = sand.u32 %s236, 1
          %s681 = smul.addr %s680, 8
          %s682 = scalar_lea.vmem [#allocation7], %s681
          %683 = dma.done %s679, 128
        $region72: #{tpu_custom_call.1} parent=67 // pred_fallthru
          _
      $region68: #{tpu_custom_call.1} parent=5 // pred_fallthru
        _
    $region6: #{tpu_custom_call.1} parent=1 // loop_footer
      %s25 = sadd.s32 1, %s21
    $region7: #{tpu_custom_call.1} parent=1 // loop_footer_branch
      %20 = sbr.rel target = $region3
    $region8: #{tpu_custom_call.1} parent=1 // loop_exit
      _
    %684 = vsyncpa [#allocation3], 1
    %s685 = scalar_lea.sflag [#allocation3], 1
    %686 = vsyncpa %s685, 1
    %687 = vsyncpa [#allocation6], 1
    %688 = vsyncpa [#allocation4], 1
    %s689 = scalar_lea.sflag [#allocation4], 1
    %690 = vsyncpa %s689, 1

</llo_original>
